<compile_context>
chip_gen: v6e
topology: v6e:2x2x1
jax: 0.10.0
libtpu: 0.0.40
codegen_flags: <defaults>
</compile_context>

<pallas_src>
import jax
import jax.numpy as jnp
from jax.experimental import pallas as pl
from jax.experimental.pallas import tpu as pltpu

_MiB = 1024 * 1024


def _silu_kernel(x_ref, o_ref):
    # Elementwise SiLU on a (row_tile, lane) block.  Compute the sigmoid in
    # f32 (EUP work is hidden under DMA; tightens bf16 numerics vs PyTorch).
    x = x_ref[...]
    xf = x.astype(jnp.float32)
    o_ref[...] = (xf * jax.nn.sigmoid(xf)).astype(o_ref.dtype)


def _vmem_capacity_bytes() -> int:
    """Physical VMEM per TensorCore; conservative fallback if query fails."""
    try:
        return int(pltpu.get_tpu_info().vmem_capacity_bytes)
    except Exception:
        return 64 * _MiB  # v7x per-TC capacity (smallest of v5e/v6e/v7x)


def _choose_lane(total: int) -> int:
    """Pick a lane-dense (multiple-of-128) row width; prefer exact divisors."""
    for cand in (4096, 2048, 1024, 512, 256, 128):
        if total % cand == 0:
            return cand
    # No exact divisor: pad.  Keep padding waste small relative to `total`.
    return 512 if total >= 4096 else 128


def efficient_memory_silu(x: jax.Array, *, donate_input: bool = False) -> jax.Array:
    """Forward pass of EfficientMemorySiLU: SiLU(x), via a Pallas TPU kernel."""
    orig_shape = x.shape
    total = x.size
    if total == 0:
        return x

    dtype_bytes = jnp.dtype(x.dtype).itemsize
    # Sublane packing: 8 rows (f32), 16 (bf16/f16), 32 (int8/fp8).
    sublane = 8 * max(1, 4 // dtype_bytes)

    # ---- lane-dense slab layout (elementwise op => free to re-tile) --------
    lane = _choose_lane(total)
    pad_total = (-(-total // lane)) * lane
    flat = x.reshape(-1)
    if pad_total != total:
        flat = jnp.pad(flat, (0, pad_total - total))
    n_rows = pad_total // lane
    x2d = flat.reshape(n_rows, lane)
    per_row_bytes = lane * dtype_bytes

    # ---- per-generation tile sizing -----------------------------------------
    vmem_cap = _vmem_capacity_bytes()
    # 4 buffers live at once (in + out, double buffered): per-buffer budget of
    # vmem_cap/8 keeps half of physical VMEM free. 8 MiB on v7x, 16 MiB on
    # v5e/v6e (roofline curve is flat past ~4 MiB; bigger blocks just shave
    # the ~0.35us per-step overhead, which matters most on v7x's fast HBM).
    budget_per_block = int(min(16 * _MiB, max(4 * _MiB, vmem_cap // 8)))

    row_tile = max(sublane, budget_per_block // per_row_bytes)
    row_tile = (row_tile // sublane) * sublane

    if n_rows >= 2 * sublane:
        # Guarantee >= 2 grid steps so ("parallel",) can split rows across
        # v7x's two TensorCores (no-op on single-TC v5e/v6e).
        half = -(-n_rows // 2)
        half_rounded = (-(-half // sublane)) * sublane
        row_tile = min(row_tile, half_rounded)
        row_tile = max(sublane, (row_tile // sublane) * sublane)
    else:
        row_tile = n_rows  # single full-extent block (always a legal block)

    grid = (pl.cdiv(n_rows, row_tile),)

    # Explicit scoped-VMEM limit so the big tiles compile (default 16/32 MiB).
    working_set = 4 * row_tile * per_row_bytes
    vmem_limit = int(
        min(
            max(working_set + 8 * _MiB, 32 * _MiB),
            max(32 * _MiB, vmem_cap - 16 * _MiB),
        )
    )

    # Advisory cost: strictly bandwidth-bound streaming op.
    cost = pl.CostEstimate(
        flops=4 * total,
        transcendentals=total,
        bytes_accessed=2 * total * dtype_bytes,
    )

    kwargs = {}
    if donate_input:
        # The whole point of EfficientMemorySiLU is not keeping the full-
        # precision activation around: let the output reuse the input buffer.
        kwargs["input_output_aliases"] = {0: 0}

    out2d = pl.pallas_call(
        _silu_kernel,
        out_shape=jax.ShapeDtypeStruct((n_rows, lane), x.dtype),
        grid=grid,
        in_specs=[pl.BlockSpec((row_tile, lane), lambda i: (i, 0))],
        out_specs=pl.BlockSpec((row_tile, lane), lambda i: (i, 0)),
        compiler_params=pltpu.CompilerParams(
            dimension_semantics=("parallel",),
            vmem_limit_bytes=vmem_limit,
        ),
        cost_estimate=cost,
        **kwargs,
    )(x2d)

    out_flat = out2d.reshape(-1)
    if pad_total != total:
        out_flat = out_flat[:total]
    return out_flat.reshape(orig_shape)


# TODO(synk): the outlier / sub-outlier int-quant / SVD activation-compression
# path (get_statistics, true_divide_outlier_suboutlier_svd_compress) only
# produces compressed activations for the custom backward pass and never
# affects the forward output, so it is intentionally not reproduced here.


if __name__ == "__main__":
    key = jax.random.PRNGKey(0)

    # Main check: shapes implied by the module (batch=2, seq=8, hidden=32).
    B, S, H = 2, 8, 32
    x = jax.random.normal(key, (B, S, H), dtype=jnp.float32)
    y = jax.block_until_ready(efficient_memory_silu(x))
    y_ref = x * jax.nn.sigmoid(x)
    assert y.shape == x.shape and y.dtype == x.dtype
    assert jnp.max(jnp.abs(y - y_ref)) < 1e-5

    # Ragged element count (exercises the lane-padding path).
    x2 = jax.random.normal(jax.random.PRNGKey(1), (3, 5, 7), dtype=jnp.float32)
    y2 = jax.block_until_ready(efficient_memory_silu(x2))
    y2_ref = x2 * jax.nn.sigmoid(x2)
    assert y2.shape == x2.shape
    assert jnp.max(jnp.abs(y2 - y2_ref)) < 1e-5

    # bf16 input (sigmoid computed in f32 inside the kernel).
    xb = jax.random.normal(jax.random.PRNGKey(2), (4, 8, 128), dtype=jnp.bfloat16)
    yb = jax.block_until_ready(efficient_memory_silu(xb))
    xb_f32 = xb.astype(jnp.float32)
    yb_ref = (xb_f32 * jax.nn.sigmoid(xb_f32)).astype(jnp.bfloat16)
    assert yb.dtype == jnp.bfloat16
    assert jnp.max(jnp.abs(yb.astype(jnp.float32) - yb_ref.astype(jnp.float32))) < 2e-2

    print("KERNEL_OK")
</pallas_src>

<mosaic_0001>
module attributes {stable_mosaic.version = 11 : i64} {
  func.func @_silu_kernel(%arg0: i32, %arg1: memref<1x512xf32, #tpu.memory_space<vmem>>, %arg2: memref<1x512xf32, #tpu.memory_space<vmem>>) attributes {dimension_semantics = [#tpu.dimension_semantics<parallel>], iteration_bounds = array<i64: 1>, scalar_prefetch = 0 : i64, scratch_operands = 0 : i64, tpu.core_type = #tpu.core_type<tc>, window_params = [{transform_indices = @transform_0, window_bounds = array<i64: 1, 512>}, {transform_indices = @transform_1, window_bounds = array<i64: 1, 512>}]} {
    %c0 = arith.constant 0 : index
    %c0_0 = arith.constant 0 : index
    %0 = vector.load %arg1[%c0, %c0_0] : memref<1x512xf32, #tpu.memory_space<vmem>>, vector<1x512xf32>
    %1 = arith.negf %0 : vector<1x512xf32>
    %2 = math.exp %1 : vector<1x512xf32>
    %cst = arith.constant 1.000000e+00 : f32
    %3 = vector.broadcast %cst : f32 to vector<1x512xf32>
    %4 = arith.addf %3, %2 : vector<1x512xf32>
    %5 = arith.divf %3, %4 : vector<1x512xf32>
    %6 = arith.mulf %0, %5 : vector<1x512xf32>
    %c0_1 = arith.constant 0 : index
    %c0_2 = arith.constant 0 : index
    %7 = vector.load %arg2[%c0_1, %c0_2] : memref<1x512xf32, #tpu.memory_space<vmem>>, vector<1x512xf32>
    tpu.vector_store %arg2[%c0_1, %c0_2], %6 {strides = array<i32>} : memref<1x512xf32, #tpu.memory_space<vmem>>, vector<1x512xf32>,
    return
  }
  func.func @transform_0(%arg0: i32) -> (i32, i32) {
    %c0_i32 = arith.constant 0 : i32
    %c0_i32_0 = arith.constant 0 : i32
    return %arg0, %c0_i32 : i32, i32
  }
  func.func @transform_1(%arg0: i32) -> (i32, i32) {
    %c0_i32 = arith.constant 0 : i32
    %c0_i32_0 = arith.constant 0 : i32
    return %arg0, %c0_i32 : i32, i32
  }
}

</mosaic_0001>

<llo_original>
// kernel: tpu_custom_call.1
$region0: #{tpu_custom_call.1}
  #allocation0 [shape = 'u32[]', space=smem, size = 0x4, offset = 0x4, fixed_abs, tag = 'smem constant byte address 0x4 - core index']
  #allocation1 [shape = 'u32[144,128]{1,0:T(1,128)}', space=vmem, size = 0x12000, scoped, tag = 'internal scratch']
  %s0 = inlined_call_operand.hbm [shape: f32[1,512], index: 0, kind: input, shape index: {}]
  %s1 = inlined_call_operand.hbm [shape: f32[1,512], index: 1, kind: output, shape index: {}]
  %s2 = sld [smem:[#allocation0]]
  $region18: #{tpu_custom_call.1} parent=0
    _
  %s4 = ssub.s32 1, %s2
  %s5 = scalar_select 0, %s4, %s2
  $region1: #{tpu_custom_call.1} parent=0
    #allocation2 [shape = 'u8[2048]{0}', space=vmem, size = 0x800, scoped, tag = 'input window, operand 0, single buffered']
    #allocation3 [shape = 's32[1]{0}', space=sflag, size = 0x4, scoped, tag = 'scoped memory for tpu_custom_call.1']
    #allocation4 [shape = 's32[1]{0}', space=sflag, size = 0x4, scoped, tag = 'scoped memory for tpu_custom_call.1']
    #allocation5 [shape = 'u8[2048]{0}', space=vmem, size = 0x800, scoped, tag = 'output window, operand 0, single buffered']
    %6 = vsyncpa [#allocation3], 0
    %7 = vsyncpa [#allocation4], 0
    // Predicated region
    $region2: #{tpu_custom_call.1} parent=1 // pred_check
      _
    $region3: #{tpu_custom_call.1} parent=1 // pred_check_branch
      %9 = sbr.rel (0) target = $region5
    $region4: #{tpu_custom_call.1} parent=1 // pred_region
      %s11 = ssub.s32 64, 64
      %12 = vsyncadd [#allocation3], %s11
      %s14 = sshll.u32 [#allocation2], 4
      %s15 = int_to_ptr.vmem [resolvable:$true] %s14
      %17 = dma.hbm_to_vmem [thread:$0]  %s0, 64, %s15, [#allocation3]
    $region5: #{tpu_custom_call.1} parent=1 // pred_fallthru
      _
    // Predicated region
    $region6: #{tpu_custom_call.1} parent=1 // pred_check
      _
    $region7: #{tpu_custom_call.1} parent=1 // pred_check_branch
      %19 = sbr.rel (0) target = $region9
    $region8: #{tpu_custom_call.1} parent=1 // pred_region
      %20 = dma.done [#allocation3], 64
    $region9: #{tpu_custom_call.1} parent=1 // pred_fallthru
      _
    %v21 = vld [vmem:[#allocation2] sm:$0xf]
    %v22 = vxor.u32 %v21, 2147483648
    %v23 = vmul.f32 %v22, 1.442695
    %v24 = vpow.pop %v23
    %v25 = vadd.f32 %v24, 1.0
    %v26 = vrcp.pop %v25
    %v27 = vmul.f32 1.0, %v26
    %v28 = vmul.f32 %v21, %v27
    %v29 = vlaneseq
    %vm30 = vcmp.ge.s32.totalorder %v29, 0
    %vm31 = vcmp.lt.s32.totalorder %v29, 512
    %vm32 = vmand %vm30, %vm31
    %33 = vst.msk [vmem:[#allocation5] sm:$0xf] %vm32, %v28
    // Predicated region
    $region10: #{tpu_custom_call.1} parent=1 // pred_check
      _
    $region11: #{tpu_custom_call.1} parent=1 // pred_check_branch
      %35 = sbr.rel (0) target = $region13
    $region12: #{tpu_custom_call.1} parent=1 // pred_region
      %s37 = ssub.s32 64, 64
      %38 = vsyncadd [#allocation4], %s37
      %s40 = sshll.u32 [#allocation5], 4
      %s41 = int_to_ptr.vmem [resolvable:$true] %s40
      %43 = dma.vmem_to_hbm [thread:$0]  %s41, 64, %s1, [#allocation4]
    $region13: #{tpu_custom_call.1} parent=1 // pred_fallthru
      _
    // Predicated region
    $region14: #{tpu_custom_call.1} parent=1 // pred_check
      _
    $region15: #{tpu_custom_call.1} parent=1 // pred_check_branch
      %45 = sbr.rel (0) target = $region17
    $region16: #{tpu_custom_call.1} parent=1 // pred_region
      %46 = dma.done [#allocation4], 64
    $region17: #{tpu_custom_call.1} parent=1 // pred_fallthru
      _
    %47 = vsyncpa [#allocation3], 1
    %48 = vsyncpa [#allocation4], 1

</llo_original>
